<compile_context>
chip_gen: v6e
topology: v6e:2x2x1
jax: 0.10.0
libtpu: 0.0.40
codegen_flags: <defaults>
</compile_context>

<pallas_src>
import functools

import jax
import jax.numpy as jnp
from jax.experimental import pallas as pl
from jax.experimental.pallas import tpu as pltpu


def _linear_kernel(x_ref, w_ref, b_ref, o_ref, acc_ref, *, K, tk):
    # x_ref:(tb, tk) VMEM, w_ref:(1, tk) VMEM, b_ref:(1, 1) SMEM,
    # o_ref:(1, tb) VMEM (lane-dense), acc_ref:(1, tb) f32 VMEM scratch.
    k = pl.program_id(1)

    @pl.when(k == 0)
    def _init():
        acc_ref[...] = jnp.zeros_like(acc_ref)

    x = x_ref[...]
    w = w_ref[...]
    if K % tk:  # static check: ragged last K tile -> zero the padded columns
        col = jax.lax.broadcasted_iota(jnp.int32, (1, tk), 1)
        valid = col < (K - k * tk)
        x = jnp.where(valid, x, 0)
        w = jnp.where(valid, w, 0)

    # (1, tk) . (tb, tk) contracted over K -> (1, tb): lane-dense partial GEMV,
    # accumulated in f32.
    acc_ref[...] += jax.lax.dot_general(
        w, x, (((1,), (1,)), ((), ())), preferred_element_type=jnp.float32)

    @pl.when(k == pl.num_programs(1) - 1)
    def _finalize():
        o_ref[...] = (acc_ref[...] + b_ref[0, 0]).astype(o_ref.dtype)


def _choose_tiles(B, K, itemsize):
    """Pick (tb, tk, nb, nk) so each x slab is a few MiB (HBM-bound kernel)."""
    LANE, SUB = 128, 8
    TARGET_X_BYTES = 6 << 20   # per x buffer; Pallas double-buffers the spec
    TB_MIN = 512               # split K rather than shrink batch tiles below this
    TB_MAX = 32768             # bound the per-step (1, tb) result / accumulator

    row_bytes = K * itemsize
    if TB_MIN * row_bytes <= TARGET_X_BYTES:
        tk = K                                        # no K split needed
    else:
        tk = (TARGET_X_BYTES // (TB_MIN * itemsize)) // LANE * LANE
        tk = int(max(LANE, min(tk, K)))

    tb = int(min(TARGET_X_BYTES // (tk * itemsize), B, TB_MAX))
    if tb < B:
        tb = (tb // SUB) * SUB   # partial batch tiles need 8-row alignment
    nb = pl.cdiv(B, tb)

    # v7x megacore: both TensorCores should get (ideally equal) work once B is
    # large enough to split without making tiles tiny.
    if B >= 2 * TB_MIN and nb % 2 == 1:
        tb = ((pl.cdiv(B, nb + 1) + SUB - 1) // SUB) * SUB
        nb = pl.cdiv(B, tb)

    nk = pl.cdiv(K, tk)
    return tb, tk, nb, nk


def _vmem_limit(tb, tk, itemsize):
    est = (2 * tb * tk * itemsize   # x blocks (double-buffered)
           + 2 * tk * itemsize      # weight blocks (double-buffered)
           + 2 * tb * itemsize      # lane-dense out blocks (double-buffered)
           + tb * 4)                # f32 accumulator scratch
    # Floor of 32 MiB (plenty of headroom), cap at 48 MiB (< v7x 64 MiB VMEM).
    return int(min(48 << 20, max(32 << 20, est + (8 << 20))))


def linear_regressor(x, weight, bias):
    """Forward pass of nn.Linear(input_size, 1): y = x @ weight.T + bias."""
    B, K = x.shape
    tb, tk, nb, nk = _choose_tiles(B, K, x.dtype.itemsize)
    bias2d = bias.reshape(1, 1)

    kernel = functools.partial(_linear_kernel, K=K, tk=tk)
    out = pl.pallas_call(
        kernel,
        out_shape=jax.ShapeDtypeStruct((nb, tb), x.dtype),
        grid_spec=pltpu.PrefetchScalarGridSpec(
            num_scalar_prefetch=0,
            grid=(nb, nk),
            in_specs=[
                # x: streamed (tb, tk) slabs, double-buffered by Pallas.
                pl.BlockSpec((tb, tk), lambda i, k: (i, k)),
                # weight: tiny (1, tk) slabs, streamed along K.
                pl.BlockSpec((1, tk), lambda i, k: (0, k)),
                # bias: scalar in SMEM.
                pl.BlockSpec(memory_space=pltpu.MemorySpace.SMEM),
            ],
            # Lane-dense output: one contiguous (1, tb) row per batch tile,
            # written back once per batch tile (constant across the K axis).
            out_specs=pl.BlockSpec((1, tb), lambda i, k: (i, 0)),
            scratch_shapes=[pltpu.VMEM((1, tb), jnp.float32)],
        ),
        compiler_params=pltpu.CompilerParams(
            dimension_semantics=("parallel", "arbitrary"),
            vmem_limit_bytes=_vmem_limit(tb, tk, x.dtype.itemsize),
        ),
    )(x, weight, bias2d)
    # (nb, tb) lane-dense tiles -> (B, 1); drop rows of the padded last tile.
    return out.reshape(nb * tb)[:B].reshape(B, 1)


if __name__ == "__main__":
    key = jax.random.PRNGKey(0)
    k_x, k_w, k_b = jax.random.split(key, 3)

    batch = 8
    input_size = 32

    x = jax.random.normal(k_x, (batch, input_size), dtype=jnp.float32)
    # Deterministic init matching nn.Linear's uniform(-1/sqrt(K), 1/sqrt(K)).
    bound = 1.0 / jnp.sqrt(jnp.float32(input_size))
    weight = jax.random.uniform(k_w, (1, input_size), jnp.float32, -bound, bound)
    bias = jax.random.uniform(k_b, (1,), jnp.float32, -bound, bound)

    fwd = jax.jit(linear_regressor)
    out = fwd(x, weight, bias)
    jax.block_until_ready(out)

    # Correctness check against plain JAX reference.
    ref = x @ weight.T + bias
    assert out.shape == (batch, 1)
    assert jnp.allclose(out, ref, atol=1e-5), (out, ref)

    print("KERNEL_OK")
</pallas_src>

<mosaic_0001>
module attributes {stable_mosaic.version = 11 : i64} {
  func.func @_linear_kernel(%arg0: i32, %arg1: i32, %arg2: memref<8x32xf32, #tpu.memory_space<vmem>>, %arg3: memref<1x32xf32, #tpu.memory_space<vmem>>, %arg4: memref<1x1xf32, #tpu.memory_space<smem>>, %arg5: memref<1x8xf32, #tpu.memory_space<vmem>>, %arg6: memref<1x8xf32, #tpu.memory_space<vmem>>) attributes {dimension_semantics = [#tpu.dimension_semantics<parallel>, #tpu.dimension_semantics<arbitrary>], iteration_bounds = array<i64: 1, 1>, scalar_prefetch = 0 : i64, scratch_operands = 1 : i64, tpu.core_type = #tpu.core_type<tc>, window_params = [{transform_indices = @transform_0, window_bounds = array<i64: 8, 32>}, {transform_indices = @transform_1, window_bounds = array<i64: 1, 32>}, {transform_indices = @transform_2, window_bounds = array<i64: 1, 1>}, {transform_indices = @transform_3, window_bounds = array<i64: 1, 8>}]} {
    %c0_i32 = arith.constant 0 : i32
    %0 = arith.cmpi eq, %arg1, %c0_i32 : i32
    %1 = arith.extui %0 : i1 to i32
    %c0_i32_0 = arith.constant 0 : i32
    %2 = arith.cmpi ne, %1, %c0_i32_0 : i32
    scf.if %2 {
      %cst_10 = arith.constant 0.000000e+00 : f32
      %12 = vector.broadcast %cst_10 : f32 to vector<1x8xf32>
      %c0_11 = arith.constant 0 : index
      %c0_12 = arith.constant 0 : index
      %13 = vector.load %arg6[%c0_11, %c0_12] : memref<1x8xf32, #tpu.memory_space<vmem>>, vector<1x8xf32>
      tpu.vector_store %arg6[%c0_11, %c0_12], %12 {strides = array<i32>} : memref<1x8xf32, #tpu.memory_space<vmem>>, vector<1x8xf32>,
    } else {
    }
    %c0 = arith.constant 0 : index
    %c0_1 = arith.constant 0 : index
    %3 = vector.load %arg2[%c0, %c0_1] : memref<8x32xf32, #tpu.memory_space<vmem>>, vector<8x32xf32>
    %c0_2 = arith.constant 0 : index
    %c0_3 = arith.constant 0 : index
    %4 = vector.load %arg3[%c0_2, %c0_3] : memref<1x32xf32, #tpu.memory_space<vmem>>, vector<1x32xf32>
    %c0_4 = arith.constant 0 : index
    %c0_5 = arith.constant 0 : index
    %5 = vector.load %arg6[%c0_4, %c0_5] : memref<1x8xf32, #tpu.memory_space<vmem>>, vector<1x8xf32>
    %cst = arith.constant dense<0.000000e+00> : vector<1x8xf32>
    %6 = tpu.matmul %4, %3, %cst {dimension_numbers = #tpu.dot_dimension_numbers<[1], [1], [0], [0], [0, 0, 1, 0], [], []>} : vector<1x32xf32>, vector<8x32xf32>, vector<1x8xf32> -> vector<1x8xf32>
    %7 = arith.addf %5, %6 : vector<1x8xf32>
    %c0_6 = arith.constant 0 : index
    %c0_7 = arith.constant 0 : index
    %8 = vector.load %arg6[%c0_6, %c0_7] : memref<1x8xf32, #tpu.memory_space<vmem>>, vector<1x8xf32>
    tpu.vector_store %arg6[%c0_6, %c0_7], %7 {strides = array<i32>} : memref<1x8xf32, #tpu.memory_space<vmem>>, vector<1x8xf32>,
    %c0_i32_8 = arith.constant 0 : i32
    %9 = arith.cmpi eq, %arg1, %c0_i32_8 : i32
    %10 = arith.extui %9 : i1 to i32
    %c0_i32_9 = arith.constant 0 : i32
    %11 = arith.cmpi ne, %10, %c0_i32_9 : i32
    scf.if %11 {
      %c0_10 = arith.constant 0 : index
      %c0_11 = arith.constant 0 : index
      %12 = vector.load %arg6[%c0_10, %c0_11] : memref<1x8xf32, #tpu.memory_space<vmem>>, vector<1x8xf32>
      %c0_12 = arith.constant 0 : index
      %c0_13 = arith.constant 0 : index
      %13 = memref.load %arg4[%c0_12, %c0_13] : memref<1x1xf32, #tpu.memory_space<smem>>
      %14 = vector.broadcast %13 : f32 to vector<1x8xf32>
      %15 = arith.addf %12, %14 : vector<1x8xf32>
      %c0_14 = arith.constant 0 : index
      %c0_15 = arith.constant 0 : index
      %16 = vector.load %arg5[%c0_14, %c0_15] : memref<1x8xf32, #tpu.memory_space<vmem>>, vector<1x8xf32>
      tpu.vector_store %arg5[%c0_14, %c0_15], %15 {strides = array<i32>} : memref<1x8xf32, #tpu.memory_space<vmem>>, vector<1x8xf32>,
    } else {
    }
    return
  }
  func.func @transform_0(%arg0: i32, %arg1: i32) -> (i32, i32) {
    %c0_i32 = arith.constant 0 : i32
    return %arg0, %arg1 : i32, i32
  }
  func.func @transform_1(%arg0: i32, %arg1: i32) -> (i32, i32) {
    %c0_i32 = arith.constant 0 : i32
    %c0_i32_0 = arith.constant 0 : i32
    return %c0_i32, %arg1 : i32, i32
  }
  func.func @transform_2(%arg0: i32, %arg1: i32) -> (i32, i32) {
    %c0_i32 = arith.constant 0 : i32
    %c0_i32_0 = arith.constant 0 : i32
    %c0_i32_1 = arith.constant 0 : i32
    return %c0_i32, %c0_i32_0 : i32, i32
  }
  func.func @transform_3(%arg0: i32, %arg1: i32) -> (i32, i32) {
    %c0_i32 = arith.constant 0 : i32
    %c0_i32_0 = arith.constant 0 : i32
    return %arg0, %c0_i32 : i32, i32
  }
}

</mosaic_0001>

<llo_original>
// kernel: linear_regressor.1
$region0: #{linear_regressor.1}
  #allocation0 [shape = 'u32[]', space=smem, size = 0x4, offset = 0x4, fixed_abs, tag = 'smem constant byte address 0x4 - core index']
  #allocation1 [shape = 'u32[144,128]{1,0:T(1,128)}', space=vmem, size = 0x12000, scoped, tag = 'internal scratch']
  #allocation2 [shape = 'f32[1,8]{1,0:T(1,128)}', space=vmem, size = 0x200, scoped, tag = 'scratch operand']
  #allocation3 [shape = 'f32[1,1]{1,0:T(1,128)S(6)}', space=smem, size = 0x200, scoped, tag = 'scoped memory for linear_regressor.1']
  %s0 = inlined_call_operand.hbm [shape: f32[8,32], index: 0, kind: input, shape index: {}]
  %s1 = inlined_call_operand.vmem [shape: f32[1,32], index: 1, kind: input, shape index: {}]
  %s2 = inlined_call_operand.<no memory space> [shape: f32[1,1], index: 2, kind: input, shape index: {}]
  %s3 = inlined_call_operand.hbm [shape: f32[1,8], index: 3, kind: output, shape index: {}]
  %s4 = sld [smem:[#allocation0]]
  $region34: #{linear_regressor.1} parent=0
    _
  %s6 = ssub.s32 1, %s4
  %s7 = scalar_select 0, %s6, %s4
  %8 = sst [smem:[#allocation3]] %s2
  $region1: #{linear_regressor.1} parent=0
    #allocation4 [shape = 'u8[4096]{0}', space=vmem, size = 0x1000, scoped, tag = 'input window, operand 0, single buffered']
    #allocation5 [shape = 's32[1]{0}', space=sflag, size = 0x4, scoped, tag = 'scoped memory for linear_regressor.1']
    #allocation6 [shape = 's32[1]{0}', space=sflag, size = 0x4, scoped, tag = 'scoped memory for linear_regressor.1']
    #allocation7 [shape = 'u8[512]{0}', space=vmem, size = 0x400, scoped, tag = 'output window, operand 0, single buffered']
    %9 = vsyncpa [#allocation5], 0
    %10 = vsyncpa [#allocation6], 0
    // Predicated region
    $region2: #{linear_regressor.1} parent=1 // pred_check
      _
    $region3: #{linear_regressor.1} parent=1 // pred_check_branch
      %12 = sbr.rel (0) target = $region5
    $region4: #{linear_regressor.1} parent=1 // pred_region
      %s14 = ssub.s32 128, 128
      %15 = vsyncadd [#allocation5], %s14
      %s17 = sshll.u32 [#allocation4], 4
      %s18 = int_to_ptr.vmem [resolvable:$true] %s17
      %20 = dma.hbm_to_vmem [thread:$0]  %s0, 128, %s18, [#allocation5]
    $region5: #{linear_regressor.1} parent=1 // pred_fallthru
      _
    // Predicated region
    $region6: #{linear_regressor.1} parent=1 // pred_check
      _
    $region7: #{linear_regressor.1} parent=1 // pred_check_branch
      %22 = sbr.rel (0) target = $region9
    $region8: #{linear_regressor.1} parent=1 // pred_region
      _
    $region9: #{linear_regressor.1} parent=1 // pred_fallthru
      _
    // Predicated region
    $region10: #{linear_regressor.1} parent=1 // pred_check
      _
    $region11: #{linear_regressor.1} parent=1 // pred_check_branch
      %24 = sbr.rel (0) target = $region13
    $region12: #{linear_regressor.1} parent=1 // pred_region
      _
    $region13: #{linear_regressor.1} parent=1 // pred_fallthru
      _
    // Predicated region
    $region14: #{linear_regressor.1} parent=1 // pred_check
      _
    $region15: #{linear_regressor.1} parent=1 // pred_check_branch
      %26 = sbr.rel (0) target = $region17
    $region16: #{linear_regressor.1} parent=1 // pred_region
      %27 = dma.done [#allocation5], 128
    $region17: #{linear_regressor.1} parent=1 // pred_fallthru
      _
    %p28 = scmp.eq.s32.totalorder 0, 0
    // Predicated region
    $region18: #{linear_regressor.1} parent=1 // pred_check
      %p29 = pneg %p28
    $region19: #{linear_regressor.1} parent=1 // pred_check_branch
      %31 = sbr.rel (%p29) target = $region21
    $region20: #{linear_regressor.1} parent=1 // pred_region
      %vm32 = vcmask 57344
      %33 = vst.msk [vmem:[#allocation2] sm:$0x1] %vm32, 0.0
    $region21: #{linear_regressor.1} parent=1 // pred_fallthru
      _
    %v34 = vld [vmem:[#allocation4] sm:$0xff]
    %v35 = vld [vmem:[%s1] sm:$0x1]
    %v36 = vld [vmem:[#allocation2] sm:$0x1]
    %vm37 = vcmask 261120
    %v39 = vsel %vm37, %v35, 0
    %v42 = vsel %vm37, %v34, 0
    %44 = vmatprep.subr.mxu0 0.0
    %45 = vmatpush1.xpose.msra.mxu0 0.0
    %46 = vmatprep.subr.mxu0 0.0
    %47 = vmatpush1.xpose.msra.mxu0 0.0
    %48 = vmatprep.subr.mxu0 0.0
    %49 = vmatpush1.xpose.msra.mxu0 0.0
    %50 = vmatprep.subr.mxu0 0.0
    %51 = vmatpush1.xpose.msra.mxu0 0.0
    %52 = vmatprep.subr.mxu0 0.0
    %53 = vmatpush1.xpose.msra.mxu0 0.0
    %54 = vmatprep.subr.mxu0 0.0
    %55 = vmatpush1.xpose.msra.mxu0 0.0
    %56 = vmatprep.subr.mxu0 0.0
    %57 = vmatpush1.xpose.msra.mxu0 0.0
    %58 = vmatprep.subr.mxu0 0.0
    %59 = vmatpush1.xpose.msra.mxu0 0.0
    %60 = vmatprep.subr.mxu0 0.0
    %61 = vmatpush1.xpose.msra.mxu0 0.0
    %62 = vmatprep.subr.mxu0 0.0
    %63 = vmatpush1.xpose.msra.mxu0 0.0
    %64 = vmatprep.subr.mxu0 0.0
    %65 = vmatpush1.xpose.msra.mxu0 0.0
    %66 = vmatprep.subr.mxu0 0.0
    %67 = vmatpush1.xpose.msra.mxu0 0.0
    %68 = vmatprep.subr.mxu0 0.0
    %69 = vmatpush1.xpose.msra.mxu0 0.0
    %70 = vmatprep.subr.mxu0 0.0
    %71 = vmatpush1.xpose.msra.mxu0 0.0
    %72 = vmatprep.subr.mxu0 0.0
    %73 = vmatpush1.xpose.msra.mxu0 0.0
    %74 = vmatprep.subr.mxu0 0.0
    %75 = vmatpush1.xpose.msra.mxu0 %v42
    %76 = vmatprep.subr.mxu0 0.0
    %77 = vmatpush2.xpose.msra.mxu0 0.0
    %78 = vmatprep.subr.mxu0 0.0
    %79 = vmatpush2.xpose.msra.mxu0 0.0
    %80 = vmatprep.subr.mxu0 0.0
    %81 = vmatpush2.xpose.msra.mxu0 0.0
    %82 = vmatprep.subr.mxu0 0.0
    %83 = vmatpush2.xpose.msra.mxu0 0.0
    %84 = vmatprep.subr.mxu0 0.0
    %85 = vmatpush2.xpose.msra.mxu0 0.0
    %86 = vmatprep.subr.mxu0 0.0
    %87 = vmatpush2.xpose.msra.mxu0 0.0
    %88 = vmatprep.subr.mxu0 0.0
    %89 = vmatpush2.xpose.msra.mxu0 0.0
    %90 = vmatprep.subr.mxu0 0.0
    %91 = vmatpush2.xpose.msra.mxu0 0.0
    %92 = vmatprep.subr.mxu0 0.0
    %93 = vmatpush2.xpose.msra.mxu0 0.0
    %94 = vmatprep.subr.mxu0 0.0
    %95 = vmatpush2.xpose.msra.mxu0 0.0
    %96 = vmatprep.subr.mxu0 0.0
    %97 = vmatpush2.xpose.msra.mxu0 0.0
    %98 = vmatprep.subr.mxu0 0.0
    %99 = vmatpush2.xpose.msra.mxu0 0.0
    %100 = vmatprep.subr.mxu0 0.0
    %101 = vmatpush2.xpose.msra.mxu0 0.0
    %102 = vmatprep.subr.mxu0 0.0
    %103 = vmatpush2.xpose.msra.mxu0 0.0
    %104 = vmatprep.subr.mxu0 0.0
    %105 = vmatpush2.xpose.msra.mxu0 0.0
    %106 = vmatprep.subr.mxu0 0.0
    %107 = vmatpush2.xpose.msra.mxu0 0.0
    %108 = vmatprep.mubr.f32.mxu0 0.0
    %109 = vmatmul.mubr.f32.gmra.mxu0 %v39
    %v110 = vpop.f32.mrf.mxu0
    %v111 = vadd.f32 0.0, %v110
    %v112 = vpop.f32.mrf.mxu0
    %113 = vdwg.mxu0
    %v114 = vadd.f32 %v36, %v111
    %vm115 = vcmask 57344
    %116 = vst.msk [vmem:[#allocation2] sm:$0x1] %vm115, %v114
    // Predicated region
    $region22: #{linear_regressor.1} parent=1 // pred_check
      %p117 = pneg %p28
    $region23: #{linear_regressor.1} parent=1 // pred_check_branch
      %119 = sbr.rel (%p117) target = $region25
    $region24: #{linear_regressor.1} parent=1 // pred_region
      %v120 = vld [vmem:[#allocation2] sm:$0x1]
      %s121 = sld [smem:[#allocation3]]
      %v122 = vstv %s121
      %v123 = vadd.f32 %v120, %v122
      %124 = vst.msk [vmem:[#allocation7] sm:$0x1] %vm115, %v123
    $region25: #{linear_regressor.1} parent=1 // pred_fallthru
      _
    // Predicated region
    $region26: #{linear_regressor.1} parent=1 // pred_check
      _
    $region27: #{linear_regressor.1} parent=1 // pred_check_branch
      %126 = sbr.rel (0) target = $region29
    $region28: #{linear_regressor.1} parent=1 // pred_region
      %s128 = ssub.s32 16, 16
      %129 = vsyncadd [#allocation6], %s128
      %s131 = sshll.u32 [#allocation7], 4
      %s132 = int_to_ptr.vmem [resolvable:$true] %s131
      %134 = dma.vmem_to_hbm [thread:$0]  %s132, 16, %s3, [#allocation6]
    $region29: #{linear_regressor.1} parent=1 // pred_fallthru
      _
    // Predicated region
    $region30: #{linear_regressor.1} parent=1 // pred_check
      _
    $region31: #{linear_regressor.1} parent=1 // pred_check_branch
      %136 = sbr.rel (0) target = $region33
    $region32: #{linear_regressor.1} parent=1 // pred_region
      %137 = dma.done [#allocation6], 16
    $region33: #{linear_regressor.1} parent=1 // pred_fallthru
      _
    %138 = vsyncpa [#allocation5], 1
    %139 = vsyncpa [#allocation6], 1

</llo_original>
